<compile_context>
chip_gen: v7x
topology: tpu7x:2x2x1
jax: 0.10.0
libtpu: 0.0.40
codegen_flags: <defaults>
</compile_context>

<pallas_src>
import jax
import jax.numpy as jnp
from jax.experimental import pallas as pl
from jax.experimental.pallas import tpu as pltpu

LANE = 128       # f32 lane width
SUBLANE = 8      # f32 sublane count
NEG_INF = -1e30  # padding bias for unused logit lanes


def _round_up(n, m):
    return ((n + m - 1) // m) * m


def rnn2_kernel(xh_ref, w1_ref, b1_ref, w2_ref, b2_ref, out_ref, hid_ref):
    # Fused i2h + h2h: [B, I+H] @ [I+H, H_pad] + (bi + bh)
    pre = (
        jnp.dot(xh_ref[...], w1_ref[...], preferred_element_type=jnp.float32)
        + b1_ref[...]
    )
    hidden = jax.nn.sigmoid(pre)                 # lax.logistic -> EUP
    hid_ref[...] = hidden.astype(hid_ref.dtype)  # lane-dense [B, 128] store

    # h2o: padded hidden lanes (cols >= H) hit zero rows of w2, contribute 0.
    logits = (
        jnp.dot(hidden, w2_ref[...], preferred_element_type=jnp.float32)
        + b2_ref[...]
    )
    # log_softmax over the feature axis; padded columns carry bias -1e30 so
    # they never win the max and exp() underflows to 0 in the sum.
    m = jnp.max(logits, axis=1, keepdims=True)
    shifted = logits - m
    lse = jnp.log(jnp.sum(jnp.exp(shifted), axis=1, keepdims=True))
    out_ref[...] = (shifted - lse).astype(out_ref.dtype)


def prepare_params(params):
    """One-time glue: fuse i2h/h2h, pre-sum biases, pad features to 128 lanes."""
    wi, bi, wh, bh, wo, bo = params
    H = wh.shape[0]
    O = wo.shape[0]
    H_pad = _round_up(H, LANE)
    O_pad = _round_up(O, LANE)

    # Fused first-layer weight [I+H, H_pad]; zero-padded output columns.
    w1 = jnp.concatenate([wi.T, wh.T], axis=0)
    w1 = jnp.pad(w1, ((0, 0), (0, H_pad - H)))
    # Fused bias [1, H_pad]; zero pad (padded hidden lanes are killed by w2).
    b1 = jnp.pad((bi + bh).reshape(1, -1), ((0, 0), (0, H_pad - H)))

    # Output projection [H_pad, O_pad]: zero rows for padded hidden lanes,
    # zero cols for padded logit lanes.
    w2 = jnp.pad(wo.T, ((0, H_pad - H), (0, O_pad - O)))
    # Output bias [1, O_pad]: padded logit lanes forced to -1e30.
    b2 = jnp.pad(bo.reshape(1, -1), ((0, 0), (0, O_pad - O)),
                 constant_values=NEG_INF)

    return (w1, b1, w2, b2, H, O)


def rnn2_forward(x, h, prepped):
    """x: [B, input_size], h: [B, hidden_size]. Returns (log_probs, new_hidden)."""
    w1, b1, w2, b2, H, O = prepped
    B = x.shape[0]
    B_pad = _round_up(B, SUBLANE)
    H_pad = w1.shape[1]
    O_pad = w2.shape[1]

    # Concatenate [x | h] for the fused matmul; pad batch to full sublanes.
    xh = jnp.concatenate([x, h], axis=1)
    xh = jnp.pad(xh, ((0, B_pad - B), (0, 0)))

    out_p, hid_p = pl.pallas_call(
        rnn2_kernel,
        out_shape=(
            jax.ShapeDtypeStruct((B_pad, O_pad), x.dtype),  # log_softmax (padded)
            jax.ShapeDtypeStruct((B_pad, H_pad), x.dtype),  # new hidden (padded)
        ),
        # No grid: all operands are a few KB, single VMEM blocks.
        in_specs=[pl.BlockSpec(memory_space=pltpu.MemorySpace.VMEM)] * 5,
        out_specs=(
            pl.BlockSpec(memory_space=pltpu.MemorySpace.VMEM),
            pl.BlockSpec(memory_space=pltpu.MemorySpace.VMEM),
        ),
    )(xh, w1, b1, w2, b2)

    return out_p[:B, :O], hid_p[:B, :H]


def init_params(key, input_size, hidden_size, output_size, dtype=jnp.float32):
    """Deterministic init mimicking nn.Linear (uniform +-1/sqrt(fan_in))."""
    ks = jax.random.split(key, 6)

    def lin(kw, kb, fan_in, fan_out):
        bound = 1.0 / jnp.sqrt(jnp.asarray(fan_in, dtype))
        w = jax.random.uniform(kw, (fan_out, fan_in), dtype, -bound, bound)
        b = jax.random.uniform(kb, (fan_out,), dtype, -bound, bound)
        return w, b

    wi, bi = lin(ks[0], ks[1], input_size, hidden_size)
    wh, bh = lin(ks[2], ks[3], hidden_size, hidden_size)
    wo, bo = lin(ks[4], ks[5], hidden_size, output_size)
    return (wi, bi, wh, bh, wo, bo)


def reference_forward(x, h, params):
    wi, bi, wh, bh, wo, bo = params
    hidden = jax.nn.sigmoid(x @ wi.T + bi + h @ wh.T + bh)
    logits = hidden @ wo.T + bo
    return jax.nn.log_softmax(logits, axis=1), hidden


if __name__ == "__main__":
    input_size, hidden_size, output_size = 16, 32, 10
    batch = 2

    key = jax.random.PRNGKey(0)
    k_x, k_h, k_p = jax.random.split(key, 3)

    x = jax.random.normal(k_x, (batch, input_size), jnp.float32)
    # init_hidden() in the module is zeros(1, hidden); broadcast to batch.
    h = jnp.zeros((batch, hidden_size), jnp.float32)
    params = init_params(k_p, input_size, hidden_size, output_size)
    prepped = prepare_params(params)

    out, new_h = rnn2_forward(x, h, prepped)
    jax.block_until_ready((out, new_h))

    ref_out, ref_h = reference_forward(x, h, params)
    assert out.shape == ref_out.shape and new_h.shape == ref_h.shape
    assert jnp.allclose(out, ref_out, atol=2e-5, rtol=2e-5)
    assert jnp.allclose(new_h, ref_h, atol=2e-5, rtol=2e-5)

    print("KERNEL_OK")
</pallas_src>

<mosaic_0001>
module attributes {stable_mosaic.version = 11 : i64} {
  func.func @rnn2_kernel(%arg0: memref<8x48xf32, #tpu.memory_space<vmem>>, %arg1: memref<48x128xf32, #tpu.memory_space<vmem>>, %arg2: memref<1x128xf32, #tpu.memory_space<vmem>>, %arg3: memref<128x128xf32, #tpu.memory_space<vmem>>, %arg4: memref<1x128xf32, #tpu.memory_space<vmem>>, %arg5: memref<8x128xf32, #tpu.memory_space<vmem>>, %arg6: memref<8x128xf32, #tpu.memory_space<vmem>>) attributes {dimension_semantics = [], scalar_prefetch = 0 : i64, scratch_operands = 0 : i64, tpu.core_type = #tpu.core_type<tc>} {
    %c0 = arith.constant 0 : index
    %c0_0 = arith.constant 0 : index
    %0 = vector.load %arg0[%c0, %c0_0] : memref<8x48xf32, #tpu.memory_space<vmem>>, vector<8x48xf32>
    %c0_1 = arith.constant 0 : index
    %c0_2 = arith.constant 0 : index
    %1 = vector.load %arg1[%c0_1, %c0_2] : memref<48x128xf32, #tpu.memory_space<vmem>>, vector<48x128xf32>
    %cst = arith.constant dense<0.000000e+00> : vector<8x128xf32>
    %2 = tpu.matmul %0, %1, %cst {dimension_numbers = #tpu.dot_dimension_numbers<[1], [0], [0], [1], [0, 0, 1, 1], [], []>} : vector<8x48xf32>, vector<48x128xf32>, vector<8x128xf32> -> vector<8x128xf32>
    %c0_3 = arith.constant 0 : index
    %c0_4 = arith.constant 0 : index
    %3 = vector.load %arg2[%c0_3, %c0_4] : memref<1x128xf32, #tpu.memory_space<vmem>>, vector<1x128xf32>
    %4 = vector.broadcast %3 : vector<1x128xf32> to vector<8x128xf32>
    %5 = arith.addf %2, %4 : vector<8x128xf32>
    %6 = arith.negf %5 : vector<8x128xf32>
    %7 = math.exp %6 : vector<8x128xf32>
    %cst_5 = arith.constant 1.000000e+00 : f32
    %8 = vector.broadcast %cst_5 : f32 to vector<8x128xf32>
    %9 = arith.addf %8, %7 : vector<8x128xf32>
    %10 = arith.divf %8, %9 : vector<8x128xf32>
    %c0_6 = arith.constant 0 : index
    %c0_7 = arith.constant 0 : index
    %11 = vector.load %arg6[%c0_6, %c0_7] : memref<8x128xf32, #tpu.memory_space<vmem>>, vector<8x128xf32>
    tpu.vector_store %arg6[%c0_6, %c0_7], %10 {strides = array<i32>} : memref<8x128xf32, #tpu.memory_space<vmem>>, vector<8x128xf32>,
    %c0_8 = arith.constant 0 : index
    %c0_9 = arith.constant 0 : index
    %12 = vector.load %arg3[%c0_8, %c0_9] : memref<128x128xf32, #tpu.memory_space<vmem>>, vector<128x128xf32>
    %cst_10 = arith.constant dense<0.000000e+00> : vector<8x128xf32>
    %13 = tpu.matmul %10, %12, %cst_10 {dimension_numbers = #tpu.dot_dimension_numbers<[1], [0], [0], [1], [0, 0, 1, 1], [], []>} : vector<8x128xf32>, vector<128x128xf32>, vector<8x128xf32> -> vector<8x128xf32>
    %c0_11 = arith.constant 0 : index
    %c0_12 = arith.constant 0 : index
    %14 = vector.load %arg4[%c0_11, %c0_12] : memref<1x128xf32, #tpu.memory_space<vmem>>, vector<1x128xf32>
    %15 = vector.broadcast %14 : vector<1x128xf32> to vector<8x128xf32>
    %16 = arith.addf %13, %15 : vector<8x128xf32>
    %cst_13 = arith.constant dense<0xFF800000> : vector<8xf32>
    %17 = vector.multi_reduction <maximumf>, %16, %cst_13 [1] : vector<8x128xf32> to vector<8xf32>
    %18 = vector.shape_cast %17 : vector<8xf32> to vector<8x1xf32>
    %19 = vector.broadcast %18 : vector<8x1xf32> to vector<8x128xf32>
    %20 = arith.subf %16, %19 : vector<8x128xf32>
    %21 = math.exp %20 : vector<8x128xf32>
    %cst_14 = arith.constant dense<0.000000e+00> : vector<8xf32>
    %22 = vector.multi_reduction <add>, %21, %cst_14 [1] : vector<8x128xf32> to vector<8xf32>
    %23 = vector.shape_cast %22 : vector<8xf32> to vector<8x1xf32>
    %24 = math.log %23 : vector<8x1xf32>
    %25 = vector.broadcast %24 : vector<8x1xf32> to vector<8x128xf32>
    %26 = arith.subf %20, %25 : vector<8x128xf32>
    %c0_15 = arith.constant 0 : index
    %c0_16 = arith.constant 0 : index
    %27 = vector.load %arg5[%c0_15, %c0_16] : memref<8x128xf32, #tpu.memory_space<vmem>>, vector<8x128xf32>
    tpu.vector_store %arg5[%c0_15, %c0_16], %26 {strides = array<i32>} : memref<8x128xf32, #tpu.memory_space<vmem>>, vector<8x128xf32>,
    return
  }
}

</mosaic_0001>

<llo_original>
// kernel: tpu_custom_call.1
$region0: #{tpu_custom_call.1}
  #allocation0 [shape = 'u32[]', space=smem, size = 0x4, offset = 0x4, fixed_abs, tag = 'smem constant byte address 0x4 - core index']
  #allocation1 [shape = 'u32[144,128]{1,0:T(1,128)}', space=vmem, size = 0x12000, scoped, tag = 'internal scratch']
  %s0 = inlined_call_operand.hbm [shape: f32[8,48], index: 0, kind: input, shape index: {}]
  %s1 = inlined_call_operand.hbm [shape: f32[48,128], index: 1, kind: input, shape index: {}]
  %s2 = inlined_call_operand.vmem [shape: f32[1,128], index: 2, kind: input, shape index: {}]
  %s3 = inlined_call_operand.hbm [shape: f32[128,128], index: 3, kind: input, shape index: {}]
  %s4 = inlined_call_operand.vmem [shape: f32[1,128], index: 4, kind: input, shape index: {}]
  %s5 = inlined_call_operand.hbm [shape: f32[8,128], index: 5, kind: output, shape index: {0}]
  %s6 = inlined_call_operand.hbm [shape: f32[8,128], index: 6, kind: output, shape index: {1}]
  %7 = xla_tuple %s5, %s6
  %s8 = sld [smem:[#allocation0]]
  $region50: #{tpu_custom_call.1} parent=0
    _
  %s10 = ssub.s32 1, %s8
  %s11 = scalar_select 0, %s10, %s8
  $region1: #{tpu_custom_call.1} parent=0
    #allocation2 [shape = 'u8[4096]{0}', space=vmem, size = 0x1000, scoped, tag = 'input window, operand 0, single buffered']
    #allocation3 [shape = 's32[1]{0}', space=sflag, size = 0x4, scoped, tag = 'scoped memory for tpu_custom_call.1']
    #allocation4 [shape = 's32[1]{0}', space=sflag, size = 0x4, scoped, tag = 'scoped memory for tpu_custom_call.1']
    #allocation5 [shape = 'u8[24576]{0}', space=vmem, size = 0x6000, scoped, tag = 'input window, operand 1, single buffered']
    #allocation6 [shape = 's32[1]{0}', space=sflag, size = 0x4, scoped, tag = 'scoped memory for tpu_custom_call.1']
    #allocation7 [shape = 'u8[65536]{0}', space=vmem, size = 0x10000, scoped, tag = 'input window, operand 3, single buffered']
    #allocation8 [shape = 'u8[4096]{0}', space=vmem, size = 0x1000, scoped, tag = 'output window, operand 0, single buffered']
    #allocation9 [shape = 'u8[4096]{0}', space=vmem, size = 0x1000, scoped, tag = 'output window, operand 1, single buffered']
    #allocation10 [shape = 's32[1]{0}', space=sflag, size = 0x4, scoped, tag = 'scoped memory for tpu_custom_call.1']
    %12 = vsyncpa [#allocation3], 0
    %13 = vsyncpa [#allocation6], 0
    %14 = vsyncpa [#allocation4], 0
    %15 = vsyncpa [#allocation10], 0
    // Predicated region
    $region2: #{tpu_custom_call.1} parent=1 // pred_check
      _
    $region3: #{tpu_custom_call.1} parent=1 // pred_check_branch
      %17 = sbr.rel (0) target = $region5
    $region4: #{tpu_custom_call.1} parent=1 // pred_region
      %s19 = ssub.s32 128, 128
      %20 = vsyncadd [#allocation3], %s19
      %s22 = sshll.u32 [#allocation2], 4
      %s23 = int_to_ptr.vmem [resolvable:$true] %s22
      %25 = dma.hbm_to_vmem [thread:$0]  %s0, 128, %s23, [#allocation3]
    $region5: #{tpu_custom_call.1} parent=1 // pred_fallthru
      _
    // Predicated region
    $region6: #{tpu_custom_call.1} parent=1 // pred_check
      _
    $region7: #{tpu_custom_call.1} parent=1 // pred_check_branch
      %27 = sbr.rel (0) target = $region9
    $region8: #{tpu_custom_call.1} parent=1 // pred_region
      %s29 = ssub.s32 768, 768
      %30 = vsyncadd [#allocation6], %s29
      %s31 = sshll.u32 [#allocation5], 4
      %s32 = int_to_ptr.vmem [resolvable:$true] %s31
      %37 = dma.hbm_to_vmem [thread:$0]  %s1, 768, %s32, [#allocation6], 128, 128, 8
    $region9: #{tpu_custom_call.1} parent=1 // pred_fallthru
      _
    // Predicated region
    $region10: #{tpu_custom_call.1} parent=1 // pred_check
      _
    $region11: #{tpu_custom_call.1} parent=1 // pred_check_branch
      %39 = sbr.rel (0) target = $region13
    $region12: #{tpu_custom_call.1} parent=1 // pred_region
      _
    $region13: #{tpu_custom_call.1} parent=1 // pred_fallthru
      _
    // Predicated region
    $region14: #{tpu_custom_call.1} parent=1 // pred_check
      _
    $region15: #{tpu_custom_call.1} parent=1 // pred_check_branch
      %41 = sbr.rel (0) target = $region17
    $region16: #{tpu_custom_call.1} parent=1 // pred_region
      %s43 = ssub.s32 2048, 2048
      %44 = vsyncadd [#allocation6], %s43
      %s45 = sshll.u32 [#allocation7], 4
      %s46 = int_to_ptr.vmem [resolvable:$true] %s45
      %51 = dma.hbm_to_vmem [thread:$0]  %s3, 2048, %s46, [#allocation6], 128, 128, 8
    $region17: #{tpu_custom_call.1} parent=1 // pred_fallthru
      _
    // Predicated region
    $region18: #{tpu_custom_call.1} parent=1 // pred_check
      _
    $region19: #{tpu_custom_call.1} parent=1 // pred_check_branch
      %53 = sbr.rel (0) target = $region21
    $region20: #{tpu_custom_call.1} parent=1 // pred_region
      _
    $region21: #{tpu_custom_call.1} parent=1 // pred_fallthru
      _
    // Predicated region
    $region22: #{tpu_custom_call.1} parent=1 // pred_check
      _
    $region23: #{tpu_custom_call.1} parent=1 // pred_check_branch
      %55 = sbr.rel (0) target = $region25
    $region24: #{tpu_custom_call.1} parent=1 // pred_region
      %56 = dma.done [#allocation3], 128
    $region25: #{tpu_custom_call.1} parent=1 // pred_fallthru
      _
    // Predicated region
    $region26: #{tpu_custom_call.1} parent=1 // pred_check
      _
    $region27: #{tpu_custom_call.1} parent=1 // pred_check_branch
      %58 = sbr.rel (0) target = $region29
    $region28: #{tpu_custom_call.1} parent=1 // pred_region
      %59 = dma.done [#allocation6], 768
    $region29: #{tpu_custom_call.1} parent=1 // pred_fallthru
      _
    // Predicated region
    $region30: #{tpu_custom_call.1} parent=1 // pred_check
      _
    $region31: #{tpu_custom_call.1} parent=1 // pred_check_branch
      %61 = sbr.rel (0) target = $region33
    $region32: #{tpu_custom_call.1} parent=1 // pred_region
      %62 = dma.done [#allocation6], 2048
    $region33: #{tpu_custom_call.1} parent=1 // pred_fallthru
      _
    %v63 = vld [vmem:[#allocation2] sm:$0xff]
    %v64 = vld [vmem:[#allocation5] sm:$0xff]
    %v65 = vld [vmem:[#allocation5 + $0x8] sm:$0xff]
    %v66 = vld [vmem:[#allocation5 + $0x10] sm:$0xff]
    %v67 = vld [vmem:[#allocation5 + $0x18] sm:$0xff]
    %v68 = vld [vmem:[#allocation5 + $0x20] sm:$0xff]
    %v69 = vld [vmem:[#allocation5 + $0x28] sm:$0xff]
    %v70 = vld [vmem:[%s2] sm:$0x1]
    %v72 = vlaneseq
    %v73 = vshrl.u32 %v72, 7
    %v74 = vsub.s32 0, %v73
    %v75 = vrot.slane %v70, %v74
    %vm77 = vcmask 392192
    %v79 = vsel %vm77, %v63, 0
    %81 = vmatprep.subr.mxu0 0.0
    %82 = vmatpush1.msra.mxu0 %v64
    %83 = vmatprep.subr.mxu0 0.0
    %84 = vmatpush1.msra.mxu0 %v65
    %85 = vmatprep.subr.mxu0 0.0
    %86 = vmatpush1.msra.mxu0 %v66
    %87 = vmatprep.subr.mxu0 0.0
    %88 = vmatpush1.msra.mxu0 %v67
    %89 = vmatprep.subr.mxu0 0.0
    %90 = vmatpush1.msra.mxu0 %v68
    %91 = vmatprep.subr.mxu0 0.0
    %92 = vmatpush1.msra.mxu0 %v69
    %93 = vmatprep.subr.mxu0 0.0
    %94 = vmatpush1.msra.mxu0 0.0
    %95 = vmatprep.subr.mxu0 0.0
    %96 = vmatpush1.msra.mxu0 0.0
    %97 = vmatprep.subr.mxu0 0.0
    %98 = vmatpush1.msra.mxu0 0.0
    %99 = vmatprep.subr.mxu0 0.0
    %100 = vmatpush1.msra.mxu0 0.0
    %101 = vmatprep.subr.mxu0 0.0
    %102 = vmatpush1.msra.mxu0 0.0
    %103 = vmatprep.subr.mxu0 0.0
    %104 = vmatpush1.msra.mxu0 0.0
    %105 = vmatprep.subr.mxu0 0.0
    %106 = vmatpush1.msra.mxu0 0.0
    %107 = vmatprep.subr.mxu0 0.0
    %108 = vmatpush1.msra.mxu0 0.0
    %109 = vmatprep.subr.mxu0 0.0
    %110 = vmatpush1.msra.mxu0 0.0
    %111 = vmatprep.subr.mxu0 0.0
    %112 = vmatpush1.msra.mxu0 0.0
    %113 = vmatprep.subr.mxu0 0.0
    %114 = vmatpush1.msra.mxu0 0.0
    %115 = vmatprep.subr.mxu0 0.0
    %116 = vmatpush1.msra.mxu0 0.0
    %117 = vmatprep.subr.mxu0 0.0
    %118 = vmatpush1.msra.mxu0 0.0
    %119 = vmatprep.subr.mxu0 0.0
    %120 = vmatpush1.msra.mxu0 0.0
    %121 = vmatprep.subr.mxu0 0.0
    %122 = vmatpush1.msra.mxu0 0.0
    %123 = vmatprep.subr.mxu0 0.0
    %124 = vmatpush1.msra.mxu0 0.0
    %125 = vmatprep.subr.mxu0 0.0
    %126 = vmatpush1.msra.mxu0 0.0
    %127 = vmatprep.subr.mxu0 0.0
    %128 = vmatpush1.msra.mxu0 0.0
    %129 = vmatprep.subr.mxu0 0.0
    %130 = vmatpush1.msra.mxu0 0.0
    %131 = vmatprep.subr.mxu0 0.0
    %132 = vmatpush1.msra.mxu0 0.0
    %133 = vmatprep.subr.mxu0 0.0
    %134 = vmatpush1.msra.mxu0 0.0
    %135 = vmatprep.subr.mxu0 0.0
    %136 = vmatpush1.msra.mxu0 0.0
    %137 = vmatprep.subr.mxu0 0.0
    %138 = vmatpush1.msra.mxu0 0.0
    %139 = vmatprep.subr.mxu0 0.0
    %140 = vmatpush1.msra.mxu0 0.0
    %141 = vmatprep.subr.mxu0 0.0
    %142 = vmatpush1.msra.mxu0 0.0
    %143 = vmatprep.subr.mxu0 0.0
    %144 = vmatpush1.msra.mxu0 0.0
    %145 = vmatprep.mubr.f32.mxu0 0.0
    %146 = vmatmul.mubr.f32.gmra.mrb[0].mxu0 %v79
    %v147 = vpop.f32.mrb[0].mxu0
    %v148 = vadd.f32 %v75, %v147
    %v149 = vpop.f32.mrb[0].mxu0
    %150 = vdwg.mxu0
    %v151 = vxor.u32 %v148, 2147483648
    %v152 = vmul.f32 %v151, 1.442695
    %v153 = vpow.pop %v152
    %v154 = vadd.f32 %v153, 1.0
    %v155 = vrcp.pop %v154
    %v156 = vmul.f32 1.0, %v155
    %157 = vst [vmem:[#allocation9] sm:$0xff] %v156
    %v158 = vld [vmem:[#allocation7] sm:$0xff]
    %v159 = vld [vmem:[#allocation7 + $0x8] sm:$0xff]
    %v160 = vld [vmem:[#allocation7 + $0x10] sm:$0xff]
    %v161 = vld [vmem:[#allocation7 + $0x18] sm:$0xff]
    %v162 = vld [vmem:[#allocation7 + $0x20] sm:$0xff]
    %v163 = vld [vmem:[#allocation7 + $0x28] sm:$0xff]
    %v164 = vld [vmem:[#allocation7 + $0x30] sm:$0xff]
    %v165 = vld [vmem:[#allocation7 + $0x38] sm:$0xff]
    %v166 = vld [vmem:[#allocation7 + $0x40] sm:$0xff]
    %v167 = vld [vmem:[#allocation7 + $0x48] sm:$0xff]
    %v168 = vld [vmem:[#allocation7 + $0x50] sm:$0xff]
    %v169 = vld [vmem:[#allocation7 + $0x58] sm:$0xff]
    %v170 = vld [vmem:[#allocation7 + $0x60] sm:$0xff]
    %v171 = vld [vmem:[#allocation7 + $0x68] sm:$0xff]
    %v172 = vld [vmem:[#allocation7 + $0x70] sm:$0xff]
    %v173 = vld [vmem:[#allocation7 + $0x78] sm:$0xff]
    %v174 = vld [vmem:[%s4] sm:$0x1]
    %v176 = vlaneseq
    %v177 = vshrl.u32 %v176, 7
    %v178 = vsub.s32 0, %v177
    %v179 = vrot.slane %v174, %v178
    %181 = vmatprep.subr.mxu0 0.0
    %182 = vmatpush1.msra.mxu0 %v158
    %183 = vmatprep.subr.mxu0 0.0
    %184 = vmatpush1.msra.mxu0 %v159
    %185 = vmatprep.subr.mxu0 0.0
    %186 = vmatpush1.msra.mxu0 %v160
    %187 = vmatprep.subr.mxu0 0.0
    %188 = vmatpush1.msra.mxu0 %v161
    %189 = vmatprep.subr.mxu0 0.0
    %190 = vmatpush1.msra.mxu0 %v162
    %191 = vmatprep.subr.mxu0 0.0
    %192 = vmatpush1.msra.mxu0 %v163
    %193 = vmatprep.subr.mxu0 0.0
    %194 = vmatpush1.msra.mxu0 %v164
    %195 = vmatprep.subr.mxu0 0.0
    %196 = vmatpush1.msra.mxu0 %v165
    %197 = vmatprep.subr.mxu0 0.0
    %198 = vmatpush1.msra.mxu0 %v166
    %199 = vmatprep.subr.mxu0 0.0
    %200 = vmatpush1.msra.mxu0 %v167
    %201 = vmatprep.subr.mxu0 0.0
    %202 = vmatpush1.msra.mxu0 %v168
    %203 = vmatprep.subr.mxu0 0.0
    %204 = vmatpush1.msra.mxu0 %v169
    %205 = vmatprep.subr.mxu0 0.0
    %206 = vmatpush1.msra.mxu0 %v170
    %207 = vmatprep.subr.mxu0 0.0
    %208 = vmatpush1.msra.mxu0 %v171
    %209 = vmatprep.subr.mxu0 0.0
    %210 = vmatpush1.msra.mxu0 %v172
    %211 = vmatprep.subr.mxu0 0.0
    %212 = vmatpush1.msra.mxu0 %v173
    %213 = vmatprep.subr.mxu0 0.0
    %214 = vmatpush1.msra.mxu0 0.0
    %215 = vmatprep.subr.mxu0 0.0
    %216 = vmatpush1.msra.mxu0 0.0
    %217 = vmatprep.subr.mxu0 0.0
    %218 = vmatpush1.msra.mxu0 0.0
    %219 = vmatprep.subr.mxu0 0.0
    %220 = vmatpush1.msra.mxu0 0.0
    %221 = vmatprep.subr.mxu0 0.0
    %222 = vmatpush1.msra.mxu0 0.0
    %223 = vmatprep.subr.mxu0 0.0
    %224 = vmatpush1.msra.mxu0 0.0
    %225 = vmatprep.subr.mxu0 0.0
    %226 = vmatpush1.msra.mxu0 0.0
    %227 = vmatprep.subr.mxu0 0.0
    %228 = vmatpush1.msra.mxu0 0.0
    %229 = vmatprep.subr.mxu0 0.0
    %230 = vmatpush1.msra.mxu0 0.0
    %231 = vmatprep.subr.mxu0 0.0
    %232 = vmatpush1.msra.mxu0 0.0
    %233 = vmatprep.subr.mxu0 0.0
    %234 = vmatpush1.msra.mxu0 0.0
    %235 = vmatprep.subr.mxu0 0.0
    %236 = vmatpush1.msra.mxu0 0.0
    %237 = vmatprep.subr.mxu0 0.0
    %238 = vmatpush1.msra.mxu0 0.0
    %239 = vmatprep.subr.mxu0 0.0
    %240 = vmatpush1.msra.mxu0 0.0
    %241 = vmatprep.subr.mxu0 0.0
    %242 = vmatpush1.msra.mxu0 0.0
    %243 = vmatprep.subr.mxu0 0.0
    %244 = vmatpush1.msra.mxu0 0.0
    %245 = vmatprep.mubr.f32.mxu0 0.0
    %246 = vmatmul.mubr.f32.gmra.mrb[0].mxu0 %v156
    %v247 = vpop.f32.mrb[0].mxu0
    %v248 = vadd.f32 %v179, %v247
    %v249 = vpop.f32.mrb[0].mxu0
    %250 = vdwg.mxu0
    %251 = vmax.xlane.f32.xlu0 %v248
    %v252 = vpop.xlane.xlu0 %251
    %v253 = vsub.f32 %v248, %v252
    %v254 = vmul.f32 %v253, 1.442695
    %v255 = vpow.pop %v254
    %256 = vadd.xlane.f32.xlu0 %v255
    %v257 = vpop.xlane.xlu0 %256
    %v258 = vlog2.pop %v257
    %v259 = vmul.f32 %v258, 0.6931472
    %v260 = vsub.f32 %v253, %v259
    %261 = vst [vmem:[#allocation8] sm:$0xff] %v260
    // Predicated region
    $region34: #{tpu_custom_call.1} parent=1 // pred_check
      _
    $region35: #{tpu_custom_call.1} parent=1 // pred_check_branch
      %263 = sbr.rel (0) target = $region37
    $region36: #{tpu_custom_call.1} parent=1 // pred_region
      %s265 = ssub.s32 128, 128
      %266 = vsyncadd [#allocation4], %s265
      %s268 = sshll.u32 [#allocation8], 4
      %s269 = int_to_ptr.vmem [resolvable:$true] %s268
      %271 = dma.vmem_to_hbm [thread:$0]  %s269, 128, %s5, [#allocation4]
    $region37: #{tpu_custom_call.1} parent=1 // pred_fallthru
      _
    // Predicated region
    $region38: #{tpu_custom_call.1} parent=1 // pred_check
      _
    $region39: #{tpu_custom_call.1} parent=1 // pred_check_branch
      %273 = sbr.rel (0) target = $region41
    $region40: #{tpu_custom_call.1} parent=1 // pred_region
      %s275 = ssub.s32 128, 128
      %276 = vsyncadd [#allocation10], %s275
      %s278 = sshll.u32 [#allocation9], 4
      %s279 = int_to_ptr.vmem [resolvable:$true] %s278
      %281 = dma.vmem_to_hbm [thread:$0]  %s279, 128, %s6, [#allocation10]
    $region41: #{tpu_custom_call.1} parent=1 // pred_fallthru
      _
    // Predicated region
    $region42: #{tpu_custom_call.1} parent=1 // pred_check
      _
    $region43: #{tpu_custom_call.1} parent=1 // pred_check_branch
      %283 = sbr.rel (0) target = $region45
    $region44: #{tpu_custom_call.1} parent=1 // pred_region
      %284 = dma.done [#allocation4], 128
    $region45: #{tpu_custom_call.1} parent=1 // pred_fallthru
      _
    // Predicated region
    $region46: #{tpu_custom_call.1} parent=1 // pred_check
      _
    $region47: #{tpu_custom_call.1} parent=1 // pred_check_branch
      %286 = sbr.rel (0) target = $region49
    $region48: #{tpu_custom_call.1} parent=1 // pred_region
      %287 = dma.done [#allocation10], 128
    $region49: #{tpu_custom_call.1} parent=1 // pred_fallthru
      _
    %288 = vsyncpa [#allocation3], 1
    %289 = vsyncpa [#allocation6], 1
    %290 = vsyncpa [#allocation4], 1
    %291 = vsyncpa [#allocation10], 1

</llo_original>
